<compile_context>
chip_gen: v5e
topology: v5e:2x2
jax: 0.10.0
libtpu: 0.0.40
codegen_flags: <defaults>
</compile_context>

<pallas_src>
import jax
import jax.numpy as jnp
from jax.experimental import pallas as pl
from jax.experimental.pallas import tpu as pltpu


# "NT" contraction: (M, K) x (N, K) -> (M, N)  (rhs contracted on its last dim).
_NT_DIMS = (((1,), (1,)), ((), ()))


def _mlp_kernel(x_ref, w1_ref, b1_ref, w2_ref, b2_ref, w3_ref, b3_ref, o_ref):
    x = x_ref[...]                                            # (TB, dim)

    # Layer 1 on the MXU with batch in the lane (N) dimension:
    #   (8, dim) x (TB, dim)^T -> (8, TB), f32 accumulation.
    h1 = jax.lax.dot_general(w1_ref[...], x, _NT_DIMS,
                             preferred_element_type=jnp.float32)
    h1 = jnp.maximum(h1 + b1_ref[...], 0.0)                   # (8, TB) f32

    # Layers 2/3 stay fused on the f32 activations (tiny K, batch stays on lanes).
    h2 = jnp.dot(w2_ref[...], h1, preferred_element_type=jnp.float32)
    h2 = jnp.maximum(h2 + b2_ref[...], 0.0)                   # (4, TB)

    logits = jnp.dot(w3_ref[...], h2, preferred_element_type=jnp.float32)
    logits = logits + b3_ref[...]                             # (2, TB)

    # Numerically-stable softmax over the class axis (axis 0 here == PyTorch dim=1).
    # Exact division so rows sum to 1 at f32 precision (kernel is HBM-bound; free).
    m = jnp.max(logits, axis=0, keepdims=True)
    e = jnp.exp(logits - m)
    denom = jnp.sum(e, axis=0, keepdims=True)
    o_ref[...] = e / denom                                    # lane-dense (2, TB) store


def _vmem_budget_and_limit():
    """Return (per-call VMEM budget, explicit vmem_limit_bytes or None) per generation."""
    try:
        physical = int(pltpu.get_tpu_info().vmem_capacity_bytes)
    except Exception:
        physical = None
    if not physical:
        # Unknown target (e.g. interpret mode): stay inside every default scoped limit.
        return 12 * 1024 * 1024, None
    if physical <= 64 * 1024 * 1024:
        # v7x-class: only 64 MiB physical per TensorCore -- keep well under it.
        return 28 * 1024 * 1024, 40 * 1024 * 1024
    # v5e / v6e: 128 MiB physical -- raise the scoped limit past the 16/32 MiB default.
    return 48 * 1024 * 1024, 96 * 1024 * 1024


def _choose_batch_tile(batch, dim, x_itemsize, vmem_budget, max_rows=None):
    """Batch rows per grid step."""
    # VMEM bytes per batch row: double-buffered x tile + double-buffered f32 (2, TB)
    # output tile + in-kernel intermediates (loaded x, h1, h2, logits, e, out; ~f32).
    bytes_per_row = 2 * dim * x_itemsize + 2 * 2 * 4 + (dim + 24) * 4
    cap = max(8, vmem_budget // bytes_per_row)
    # Move >= ~2 MiB of x per grid step so the ~0.35 us per-step pipeline overhead is
    # amortized (this kernel is purely HBM-bandwidth bound).
    target = max(128, (2 * 1024 * 1024) // max(1, dim * x_itemsize))
    tb = min(cap, target)
    if max_rows is not None:
        tb = min(tb, max(8, max_rows))
    if batch <= tb:
        return batch                      # single step: full-extent blocks
    if tb >= 128:
        return (tb // 128) * 128          # lane-dense multiple-of-128 output stores
    return max(8, (tb // 8) * 8)          # very wide dim: respect the VMEM budget


def nnetwork_forward(x, params, *, max_rows_per_step=None):
    """x: (B, dim) f32 or bf16.  params: PyTorch-layout weights (out, in), biases (out, 1)."""
    B, dim = x.shape
    # No wrapper-side cast: stream x in whatever dtype it already has in HBM.
    w1 = params["w1"].astype(x.dtype)                  # (8, dim) - only HBM-heavy weight
    b1, w2, b2, w3, b3 = (params[k] for k in ("b1", "w2", "b2", "w3", "b3"))

    budget, vmem_limit = _vmem_budget_and_limit()
    tb = _choose_batch_tile(B, dim, jnp.dtype(x.dtype).itemsize, budget, max_rows_per_step)
    grid = (pl.cdiv(B, tb),)                           # ragged last block masked by Pallas

    const = lambda i: (0, 0)                           # weights resident across the grid
    out_t = pl.pallas_call(
        _mlp_kernel,
        out_shape=jax.ShapeDtypeStruct((2, B), jnp.float32),
        grid=grid,
        in_specs=[
            pl.BlockSpec((tb, dim), lambda i: (i, 0)),     # x: batch tiled, features full
            pl.BlockSpec(w1.shape, const),
            pl.BlockSpec(b1.shape, const),
            pl.BlockSpec(w2.shape, const),
            pl.BlockSpec(b2.shape, const),
            pl.BlockSpec(w3.shape, const),
            pl.BlockSpec(b3.shape, const),
        ],
        out_specs=pl.BlockSpec((2, tb), lambda i: (0, i)),  # lane-dense (class, batch)
        compiler_params=pltpu.CompilerParams(
            dimension_semantics=("parallel",),              # batch grid across 2 TCs (v7x)
            vmem_limit_bytes=vmem_limit,
        ),
    )(x, w1, b1, w2, b2, w3, b3)

    # NOTE: if the consumer can take (2, B) directly, skip this transpose (saves one
    # small XLA pass); the lane-dense in-kernel store layout is the load-bearing choice.
    return out_t.T


def init_params(key, dim):
    """Deterministic PyTorch-Linear-style init; weights stored (out, in), biases (out, 1)."""
    def linear(k, fan_in, fan_out):
        kw, kb = jax.random.split(k)
        bound = 1.0 / jnp.sqrt(float(fan_in))
        w = jax.random.uniform(kw, (fan_out, fan_in), jnp.float32, -bound, bound)
        b = jax.random.uniform(kb, (fan_out, 1), jnp.float32, -bound, bound)
        return w, b

    k1, k2, k3 = jax.random.split(key, 3)
    w1, b1 = linear(k1, dim, 8)
    w2, b2 = linear(k2, 8, 4)
    w3, b3 = linear(k3, 4, 2)
    return dict(w1=w1, b1=b1, w2=w2, b2=b2, w3=w3, b3=b3)


def reference_forward(x, p):
    hi = jax.lax.Precision.HIGHEST
    h1 = jnp.maximum(jnp.dot(x, p["w1"].T, precision=hi) + p["b1"][:, 0], 0.0)
    h2 = jnp.maximum(jnp.dot(h1, p["w2"].T, precision=hi) + p["b2"][:, 0], 0.0)
    logits = jnp.dot(h2, p["w3"].T, precision=hi) + p["b3"][:, 0]
    return jax.nn.softmax(logits, axis=-1)


if __name__ == "__main__":
    key = jax.random.PRNGKey(0)
    kx, kp = jax.random.split(key)

    B, dim = 8, 32
    x = jax.random.normal(kx, (B, dim), jnp.float32)
    params = init_params(kp, dim)

    # f32 path, single grid step (full-extent blocks).
    out = jax.block_until_ready(nnetwork_forward(x, params))
    ref = reference_forward(x, params)
    assert out.shape == (B, 2)
    assert jnp.allclose(out, ref, atol=5e-3, rtol=5e-3), "f32 path mismatch vs JAX reference"
    assert jnp.allclose(jnp.sum(out, axis=-1), 1.0, atol=1e-5), "softmax rows must sum to 1"

    # Multi-tile path with a ragged last block (force tile=256 -> grid=cdiv(1000,256)=4,
    # last block is 232 real rows + masked padding; no wrapper-side jnp.pad).
    B2 = 1000
    x2 = jax.random.normal(kx, (B2, dim), jnp.float32)
    out2 = jax.block_until_ready(nnetwork_forward(x2, params, max_rows_per_step=256))
    ref2 = reference_forward(x2, params)
    assert out2.shape == (B2, 2)
    assert jnp.allclose(out2, ref2, atol=5e-3, rtol=5e-3), "tiled/ragged path mismatch"
    assert jnp.allclose(jnp.sum(out2, axis=-1), 1.0, atol=1e-5), "softmax rows must sum to 1"

    # bf16-already-in-HBM streaming path (no wrapper cast; f32 accumulation in the dots).
    x3 = x.astype(jnp.bfloat16)
    out3 = jax.block_until_ready(nnetwork_forward(x3, params))
    assert out3.shape == (B, 2)
    assert jnp.allclose(out3, ref, atol=3e-2, rtol=3e-2), "bf16 path mismatch"

    print("KERNEL_OK")
</pallas_src>

<mosaic_0001>
module attributes {stable_mosaic.version = 11 : i64} {
  func.func @_mlp_kernel(%arg0: i32, %arg1: memref<8x32xf32, #tpu.memory_space<vmem>>, %arg2: memref<8x32xf32, #tpu.memory_space<vmem>>, %arg3: memref<8x1xf32, #tpu.memory_space<vmem>>, %arg4: memref<4x8xf32, #tpu.memory_space<vmem>>, %arg5: memref<4x1xf32, #tpu.memory_space<vmem>>, %arg6: memref<2x4xf32, #tpu.memory_space<vmem>>, %arg7: memref<2x1xf32, #tpu.memory_space<vmem>>, %arg8: memref<2x8xf32, #tpu.memory_space<vmem>>) attributes {dimension_semantics = [#tpu.dimension_semantics<parallel>], iteration_bounds = array<i64: 1>, scalar_prefetch = 0 : i64, scratch_operands = 0 : i64, tpu.core_type = #tpu.core_type<tc>, window_params = [{transform_indices = @transform_0, window_bounds = array<i64: 8, 32>}, {pipeline_mode = #tpu.pipeline_mode<synchronous>, transform_indices = @transform_1, window_bounds = array<i64: 8, 32>}, {pipeline_mode = #tpu.pipeline_mode<synchronous>, transform_indices = @transform_2, window_bounds = array<i64: 8, 1>}, {pipeline_mode = #tpu.pipeline_mode<synchronous>, transform_indices = @transform_3, window_bounds = array<i64: 4, 8>}, {pipeline_mode = #tpu.pipeline_mode<synchronous>, transform_indices = @transform_4, window_bounds = array<i64: 4, 1>}, {pipeline_mode = #tpu.pipeline_mode<synchronous>, transform_indices = @transform_5, window_bounds = array<i64: 2, 4>}, {pipeline_mode = #tpu.pipeline_mode<synchronous>, transform_indices = @transform_6, window_bounds = array<i64: 2, 1>}, {transform_indices = @transform_7, window_bounds = array<i64: 2, 8>}]} {
    %c0 = arith.constant 0 : index
    %c0_0 = arith.constant 0 : index
    %0 = vector.load %arg1[%c0, %c0_0] : memref<8x32xf32, #tpu.memory_space<vmem>>, vector<8x32xf32>
    %c0_1 = arith.constant 0 : index
    %c0_2 = arith.constant 0 : index
    %1 = vector.load %arg2[%c0_1, %c0_2] : memref<8x32xf32, #tpu.memory_space<vmem>>, vector<8x32xf32>
    %cst = arith.constant dense<0.000000e+00> : vector<8x8xf32>
    %2 = tpu.matmul %1, %0, %cst {dimension_numbers = #tpu.dot_dimension_numbers<[1], [1], [0], [0], [0, 0, 1, 0], [], []>} : vector<8x32xf32>, vector<8x32xf32>, vector<8x8xf32> -> vector<8x8xf32>
    %c0_3 = arith.constant 0 : index
    %c0_4 = arith.constant 0 : index
    %3 = vector.load %arg3[%c0_3, %c0_4] : memref<8x1xf32, #tpu.memory_space<vmem>>, vector<8x1xf32>
    %4 = vector.broadcast %3 : vector<8x1xf32> to vector<8x8xf32>
    %5 = arith.addf %2, %4 : vector<8x8xf32>
    %cst_5 = arith.constant 0.000000e+00 : f32
    %6 = vector.broadcast %cst_5 : f32 to vector<8x8xf32>
    %7 = arith.maximumf %5, %6 : vector<8x8xf32>
    %c0_6 = arith.constant 0 : index
    %c0_7 = arith.constant 0 : index
    %8 = vector.load %arg4[%c0_6, %c0_7] : memref<4x8xf32, #tpu.memory_space<vmem>>, vector<4x8xf32>
    %cst_8 = arith.constant dense<0.000000e+00> : vector<4x8xf32>
    %9 = tpu.matmul %8, %7, %cst_8 {dimension_numbers = #tpu.dot_dimension_numbers<[1], [0], [0], [1], [0, 0, 1, 1], [], []>} : vector<4x8xf32>, vector<8x8xf32>, vector<4x8xf32> -> vector<4x8xf32>
    %c0_9 = arith.constant 0 : index
    %c0_10 = arith.constant 0 : index
    %10 = vector.load %arg5[%c0_9, %c0_10] : memref<4x1xf32, #tpu.memory_space<vmem>>, vector<4x1xf32>
    %11 = vector.broadcast %10 : vector<4x1xf32> to vector<4x8xf32>
    %12 = arith.addf %9, %11 : vector<4x8xf32>
    %cst_11 = arith.constant 0.000000e+00 : f32
    %13 = vector.broadcast %cst_11 : f32 to vector<4x8xf32>
    %14 = arith.maximumf %12, %13 : vector<4x8xf32>
    %c0_12 = arith.constant 0 : index
    %c0_13 = arith.constant 0 : index
    %15 = vector.load %arg6[%c0_12, %c0_13] : memref<2x4xf32, #tpu.memory_space<vmem>>, vector<2x4xf32>
    %cst_14 = arith.constant dense<0.000000e+00> : vector<2x8xf32>
    %16 = tpu.matmul %15, %14, %cst_14 {dimension_numbers = #tpu.dot_dimension_numbers<[1], [0], [0], [1], [0, 0, 1, 1], [], []>} : vector<2x4xf32>, vector<4x8xf32>, vector<2x8xf32> -> vector<2x8xf32>
    %c0_15 = arith.constant 0 : index
    %c0_16 = arith.constant 0 : index
    %17 = vector.load %arg7[%c0_15, %c0_16] : memref<2x1xf32, #tpu.memory_space<vmem>>, vector<2x1xf32>
    %18 = vector.broadcast %17 : vector<2x1xf32> to vector<2x8xf32>
    %19 = arith.addf %16, %18 : vector<2x8xf32>
    %cst_17 = arith.constant dense<0xFF800000> : vector<8xf32>
    %20 = vector.multi_reduction <maximumf>, %19, %cst_17 [0] : vector<2x8xf32> to vector<8xf32>
    %21 = vector.shape_cast %20 : vector<8xf32> to vector<1x8xf32>
    %22 = vector.broadcast %21 : vector<1x8xf32> to vector<2x8xf32>
    %23 = arith.subf %19, %22 : vector<2x8xf32>
    %24 = math.exp %23 : vector<2x8xf32>
    %cst_18 = arith.constant dense<0.000000e+00> : vector<8xf32>
    %25 = vector.multi_reduction <add>, %24, %cst_18 [0] : vector<2x8xf32> to vector<8xf32>
    %26 = vector.shape_cast %25 : vector<8xf32> to vector<1x8xf32>
    %27 = vector.broadcast %26 : vector<1x8xf32> to vector<2x8xf32>
    %28 = arith.divf %24, %27 : vector<2x8xf32>
    %c0_19 = arith.constant 0 : index
    %c0_20 = arith.constant 0 : index
    %29 = vector.load %arg8[%c0_19, %c0_20] : memref<2x8xf32, #tpu.memory_space<vmem>>, vector<2x8xf32>
    tpu.vector_store %arg8[%c0_19, %c0_20], %28 {strides = array<i32>} : memref<2x8xf32, #tpu.memory_space<vmem>>, vector<2x8xf32>,
    return
  }
  func.func @transform_0(%arg0: i32) -> (i32, i32) {
    %c0_i32 = arith.constant 0 : i32
    %c0_i32_0 = arith.constant 0 : i32
    return %arg0, %c0_i32 : i32, i32
  }
  func.func @transform_1(%arg0: i32) -> (i32, i32) {
    %c0_i32 = arith.constant 0 : i32
    %c0_i32_0 = arith.constant 0 : i32
    %c0_i32_1 = arith.constant 0 : i32
    return %c0_i32, %c0_i32_0 : i32, i32
  }
  func.func @transform_2(%arg0: i32) -> (i32, i32) {
    %c0_i32 = arith.constant 0 : i32
    %c0_i32_0 = arith.constant 0 : i32
    %c0_i32_1 = arith.constant 0 : i32
    return %c0_i32, %c0_i32_0 : i32, i32
  }
  func.func @transform_3(%arg0: i32) -> (i32, i32) {
    %c0_i32 = arith.constant 0 : i32
    %c0_i32_0 = arith.constant 0 : i32
    %c0_i32_1 = arith.constant 0 : i32
    return %c0_i32, %c0_i32_0 : i32, i32
  }
  func.func @transform_4(%arg0: i32) -> (i32, i32) {
    %c0_i32 = arith.constant 0 : i32
    %c0_i32_0 = arith.constant 0 : i32
    %c0_i32_1 = arith.constant 0 : i32
    return %c0_i32, %c0_i32_0 : i32, i32
  }
  func.func @transform_5(%arg0: i32) -> (i32, i32) {
    %c0_i32 = arith.constant 0 : i32
    %c0_i32_0 = arith.constant 0 : i32
    %c0_i32_1 = arith.constant 0 : i32
    return %c0_i32, %c0_i32_0 : i32, i32
  }
  func.func @transform_6(%arg0: i32) -> (i32, i32) {
    %c0_i32 = arith.constant 0 : i32
    %c0_i32_0 = arith.constant 0 : i32
    %c0_i32_1 = arith.constant 0 : i32
    return %c0_i32, %c0_i32_0 : i32, i32
  }
  func.func @transform_7(%arg0: i32) -> (i32, i32) {
    %c0_i32 = arith.constant 0 : i32
    %c0_i32_0 = arith.constant 0 : i32
    return %c0_i32, %arg0 : i32, i32
  }
}

</mosaic_0001>

<llo_original>
// kernel: tpu_custom_call.1
$region0: #{tpu_custom_call.1}
  #allocation0 [shape = 'u32[]', space=smem, size = 0x4, offset = 0x4, fixed_abs, tag = 'smem constant byte address 0x4 - core index']
  #allocation1 [shape = 'u32[72,128]{1,0:T(1,128)}', space=vmem, size = 0x9000, scoped, tag = 'internal scratch']
  %s0 = inlined_call_operand.vmem [shape: f32[8,32], index: 0, kind: input, shape index: {}]
  %s1 = inlined_call_operand.hbm [shape: f32[8,32], index: 1, kind: input, shape index: {}]
  %s2 = inlined_call_operand.vmem [shape: f32[8,1], index: 2, kind: input, shape index: {}]
  %s3 = inlined_call_operand.vmem [shape: f32[4,8], index: 3, kind: input, shape index: {}]
  %s4 = inlined_call_operand.vmem [shape: f32[4,1], index: 4, kind: input, shape index: {}]
  %s5 = inlined_call_operand.vmem [shape: f32[2,4], index: 5, kind: input, shape index: {}]
  %s6 = inlined_call_operand.vmem [shape: f32[2,1], index: 6, kind: input, shape index: {}]
  %s7 = inlined_call_operand.hbm [shape: f32[2,8], index: 7, kind: output, shape index: {}]
  %s8 = sld [smem:[#allocation0]]
  $region42: #{tpu_custom_call.1} parent=0
    _
  %s10 = ssub.s32 1, %s8
  %s11 = scalar_select 0, %s10, %s8
  $region1: #{tpu_custom_call.1} parent=0
    #allocation2 [shape = 'u8[4096]{0}', space=vmem, size = 0x1000, scoped, tag = 'input window, operand 1, single buffered']
    #allocation3 [shape = 's32[1]{0}', space=sflag, size = 0x4, scoped, tag = 'scoped memory for tpu_custom_call.1']
    #allocation4 [shape = 's32[1]{0}', space=sflag, size = 0x4, scoped, tag = 'scoped memory for tpu_custom_call.1']
    #allocation5 [shape = 'u8[1024]{0}', space=vmem, size = 0x400, scoped, tag = 'output window, operand 0, single buffered']
    %12 = vsyncpa [#allocation3], 0
    %13 = vsyncpa [#allocation4], 0
    // Predicated region
    $region2: #{tpu_custom_call.1} parent=1 // pred_check
      _
    $region3: #{tpu_custom_call.1} parent=1 // pred_check_branch
      %15 = sbr.rel (0) target = $region5
    $region4: #{tpu_custom_call.1} parent=1 // pred_region
      _
    $region5: #{tpu_custom_call.1} parent=1 // pred_fallthru
      _
    // Predicated region
    $region6: #{tpu_custom_call.1} parent=1 // pred_check
      _
    $region7: #{tpu_custom_call.1} parent=1 // pred_check_branch
      %17 = sbr.rel (0) target = $region9
    $region8: #{tpu_custom_call.1} parent=1 // pred_region
      %19 = vsyncadd [#allocation3], 0
      %s21 = sshll.u32 %s1, 4
      %s22 = int_to_ptr.hbm [resolvable:$true] %s21
      %s23 = sshll.u32 [#allocation2], 4
      %s24 = int_to_ptr.vmem [resolvable:$true] %s23
      %26 = dma.hbm_to_vmem [thread:$0]  %s22, 128, %s24, [#allocation3]
    $region9: #{tpu_custom_call.1} parent=1 // pred_fallthru
      _
    // Predicated region
    $region10: #{tpu_custom_call.1} parent=1 // pred_check
      _
    $region11: #{tpu_custom_call.1} parent=1 // pred_check_branch
      %28 = sbr.rel (0) target = $region13
    $region12: #{tpu_custom_call.1} parent=1 // pred_region
      _
    $region13: #{tpu_custom_call.1} parent=1 // pred_fallthru
      _
    // Predicated region
    $region14: #{tpu_custom_call.1} parent=1 // pred_check
      _
    $region15: #{tpu_custom_call.1} parent=1 // pred_check_branch
      %30 = sbr.rel (0) target = $region17
    $region16: #{tpu_custom_call.1} parent=1 // pred_region
      _
    $region17: #{tpu_custom_call.1} parent=1 // pred_fallthru
      _
    // Predicated region
    $region18: #{tpu_custom_call.1} parent=1 // pred_check
      _
    $region19: #{tpu_custom_call.1} parent=1 // pred_check_branch
      %32 = sbr.rel (0) target = $region21
    $region20: #{tpu_custom_call.1} parent=1 // pred_region
      _
    $region21: #{tpu_custom_call.1} parent=1 // pred_fallthru
      _
    // Predicated region
    $region22: #{tpu_custom_call.1} parent=1 // pred_check
      _
    $region23: #{tpu_custom_call.1} parent=1 // pred_check_branch
      %34 = sbr.rel (0) target = $region25
    $region24: #{tpu_custom_call.1} parent=1 // pred_region
      _
    $region25: #{tpu_custom_call.1} parent=1 // pred_fallthru
      _
    // Predicated region
    $region26: #{tpu_custom_call.1} parent=1 // pred_check
      _
    $region27: #{tpu_custom_call.1} parent=1 // pred_check_branch
      %36 = sbr.rel (0) target = $region29
    $region28: #{tpu_custom_call.1} parent=1 // pred_region
      _
    $region29: #{tpu_custom_call.1} parent=1 // pred_fallthru
      _
    // Predicated region
    $region30: #{tpu_custom_call.1} parent=1 // pred_check
      _
    $region31: #{tpu_custom_call.1} parent=1 // pred_check_branch
      %38 = sbr.rel (0) target = $region33
    $region32: #{tpu_custom_call.1} parent=1 // pred_region
      %40 = dma.done [#allocation3], 128
    $region33: #{tpu_custom_call.1} parent=1 // pred_fallthru
      _
    %v41 = vld [vmem:[%s0] sm:$0xff]
    %v42 = vld [vmem:[#allocation2] sm:$0xff]
    %v43 = vld [vmem:[%s2] sm:$0xff]
    %45 = vset.pattern.permute.xlu0 0
    %46 = vperm.xlu0 %45, %v43
    %v47 = vpop.permute.xlu0 %46
    %vm49 = vcmask 261120
    %v51 = vsel %vm49, %v42, 0
    %v54 = vsel %vm49, %v41, 0
    %56 = vmatpush.xpose.msra.mxu0 0.0
    %57 = vmatpush.xpose.msra.mxu0 0.0
    %58 = vmatpush.xpose.msra.mxu0 0.0
    %59 = vmatpush.xpose.msra.mxu0 0.0
    %60 = vmatpush.xpose.msra.mxu0 0.0
    %61 = vmatpush.xpose.msra.mxu0 0.0
    %62 = vmatpush.xpose.msra.mxu0 0.0
    %63 = vmatpush.xpose.msra.mxu0 0.0
    %64 = vmatpush.xpose.msra.mxu0 0.0
    %65 = vmatpush.xpose.msra.mxu0 0.0
    %66 = vmatpush.xpose.msra.mxu0 0.0
    %67 = vmatpush.xpose.msra.mxu0 0.0
    %68 = vmatpush.xpose.msra.mxu0 0.0
    %69 = vmatpush.xpose.msra.mxu0 0.0
    %70 = vmatpush.xpose.msra.mxu0 0.0
    %71 = vmatpush.xpose.msra.mxu0 %v54
    %72 = vmatmul.f32.gmra.mxu0 %v51
    %v73 = vpop.f32.mrf.mxu0
    %v74 = vadd.f32 %v47, %v73
    %75 = vdwg.mxu0
    %v76 = vmax.f32 %v74, 0.0
    %v77 = vld [vmem:[%s3] sm:$0xf]
    %v78 = vld [vmem:[%s4] sm:$0xf]
    %80 = vset.pattern.permute.xlu0 0
    %81 = vperm.xlu0 %80, %v78
    %v82 = vpop.permute.xlu0 %81
    %vm84 = vcmask 64512
    %v86 = vsel %vm84, %v77, 0
    %88 = vmatpush.msra.mxu0 0.0
    %89 = vmatpush.msra.mxu0 0.0
    %90 = vmatpush.msra.mxu0 0.0
    %91 = vmatpush.msra.mxu0 0.0
    %92 = vmatpush.msra.mxu0 0.0
    %93 = vmatpush.msra.mxu0 0.0
    %94 = vmatpush.msra.mxu0 0.0
    %95 = vmatpush.msra.mxu0 0.0
    %96 = vmatpush.msra.mxu0 0.0
    %97 = vmatpush.msra.mxu0 0.0
    %98 = vmatpush.msra.mxu0 0.0
    %99 = vmatpush.msra.mxu0 0.0
    %100 = vmatpush.msra.mxu0 0.0
    %101 = vmatpush.msra.mxu0 0.0
    %102 = vmatpush.msra.mxu0 0.0
    %103 = vmatpush.msra.mxu0 %v76
    %104 = vmatmul.f32.gmra.mxu0 %v86
    %v105 = vpop.f32.mrf.mxu0
    %v106 = vadd.f32 %v82, %v105
    %107 = vdwg.mxu0
    %v108 = vmax.f32 %v106, 0.0
    %v109 = vld [vmem:[%s5] sm:$0x3]
    %v110 = vld [vmem:[%s6] sm:$0x3]
    %112 = vset.pattern.permute.xlu0 0
    %113 = vperm.xlu0 %112, %v110
    %v114 = vpop.permute.xlu0 %113
    %vm116 = vcmask 31744
    %v118 = vsel %vm116, %v109, 0
    %vm120 = vcmask 1043456
    %v122 = vsel %vm120, %v108, 0
    %124 = vmatpush.msra.mxu0 0.0
    %125 = vmatpush.msra.mxu0 0.0
    %126 = vmatpush.msra.mxu0 0.0
    %127 = vmatpush.msra.mxu0 0.0
    %128 = vmatpush.msra.mxu0 0.0
    %129 = vmatpush.msra.mxu0 0.0
    %130 = vmatpush.msra.mxu0 0.0
    %131 = vmatpush.msra.mxu0 0.0
    %132 = vmatpush.msra.mxu0 0.0
    %133 = vmatpush.msra.mxu0 0.0
    %134 = vmatpush.msra.mxu0 0.0
    %135 = vmatpush.msra.mxu0 0.0
    %136 = vmatpush.msra.mxu0 0.0
    %137 = vmatpush.msra.mxu0 0.0
    %138 = vmatpush.msra.mxu0 0.0
    %139 = vmatpush.msra.mxu0 %v122
    %140 = vmatmul.f32.gmra.mxu0 %v118
    %v141 = vpop.f32.mrf.mxu0
    %v142 = vadd.f32 %v114, %v141
    %143 = vdwg.mxu0
    %vm144 = vcmask 58368
    %v145 = vsel %vm144, %v142, -inf
    %v146 = vrot.slane %v145, 4
    %v147 = vmax.f32 %v145, %v146
    %v148 = vrot.slane %v147, 2
    %v149 = vmax.f32 %v147, %v148
    %v150 = vrot.slane %v149, 1
    %v151 = vmax.f32 %v149, %v150
    %v152 = vsub.f32 %v142, %v151
    %v153 = vmul.f32 %v152, 1.442695
    %v154 = vpow.pop %v153
    %v155 = vsel %vm144, %v154, 0.0
    %v156 = vrot.slane %v155, 4
    %v157 = vadd.f32 %v155, %v156
    %v158 = vrot.slane %v157, 2
    %v159 = vadd.f32 %v157, %v158
    %v160 = vrot.slane %v159, 1
    %v161 = vadd.f32 %v159, %v160
    %v162 = vrcp.pop %v161
    %v163 = vmul.f32 %v161, %v162
    %v164 = vsub.f32 1.0, %v163
    %v165 = vmul.f32 %v162, %v164
    %v166 = vadd.f32 %v162, %v165
    %vm167 = vweird.f32 %v161
    %vm168 = vweird.f32 %v162
    %vm169 = vmor %vm167, %vm168
    %v170 = vsel %vm169, %v162, %v166
    %v171 = vand.u32 2147483647, %v161
    %vm172 = vcmp.eq.f32.partialorder %v171, 8.507059e+37
    %v173 = vand.u32 %v161, 2147483648
    %v174 = vor.u32 1.1754944e-38, %v173
    %v175 = vsel %vm172, %v174, %v170
    %v176 = vmul.f32 %v154, %v175
    %177 = vst.msk [vmem:[#allocation5] sm:$0x3] %vm144, %v176
    // Predicated region
    $region34: #{tpu_custom_call.1} parent=1 // pred_check
      _
    $region35: #{tpu_custom_call.1} parent=1 // pred_check_branch
      %179 = sbr.rel (0) target = $region37
    $region36: #{tpu_custom_call.1} parent=1 // pred_region
      %181 = vsyncadd [#allocation4], 0
      %s183 = sshll.u32 [#allocation5], 4
      %s184 = int_to_ptr.vmem [resolvable:$true] %s183
      %s185 = sshll.u32 %s7, 4
      %s186 = int_to_ptr.hbm [resolvable:$true] %s185
      %188 = dma.vmem_to_hbm [thread:$0]  %s184, 32, %s186, [#allocation4]
    $region37: #{tpu_custom_call.1} parent=1 // pred_fallthru
      _
    // Predicated region
    $region38: #{tpu_custom_call.1} parent=1 // pred_check
      _
    $region39: #{tpu_custom_call.1} parent=1 // pred_check_branch
      %190 = sbr.rel (0) target = $region41
    $region40: #{tpu_custom_call.1} parent=1 // pred_region
      %192 = dma.done [#allocation4], 32
    $region41: #{tpu_custom_call.1} parent=1 // pred_fallthru
      _
    %193 = vsyncpa [#allocation3], 1
    %194 = vsyncpa [#allocation4], 1

</llo_original>
